<compile_context>
chip_gen: v7x
topology: tpu7x:2x2x1
jax: 0.10.0
libtpu: 0.0.40
codegen_flags: <defaults>
</compile_context>

<pallas_src>
import functools

import jax
import jax.numpy as jnp
from jax.experimental import pallas as pl
from jax.experimental.pallas import tpu as pltpu

LANE = 128
SUBLANE = 8
STATS_ROWS = 8          # sublane-aligned stats block: row0 = sum, row1 = sum of squares


def _round_up(x, m):
    return (x + m - 1) // m * m


# ---------------------------------------------------------------------------
# In-kernel helpers
# ---------------------------------------------------------------------------
def _lin(h, w_ref, b_ref):
    # bf16 MXU operands, f32 accumulation, f32 bias add.
    return jnp.dot(h.astype(w_ref.dtype), w_ref[...],
                   preferred_element_type=jnp.float32) + b_ref[...]


def _relu(h):
    return jnp.maximum(h, 0.0)


# ---------------------------------------------------------------------------
# Kernel A: dropout + fc1..fc4 (encoder front) + per-tile BN partial stats.
# Grid over batch tiles, "parallel" (each step writes disjoint output blocks).
# ---------------------------------------------------------------------------
def _encoder_kernel(x_ref, mask_ref, w1, b1, w2, b2, w3, b3, w4, b4,
                    h4_ref, stats_ref, *, inv_keep):
    # inverted dropout: mask is {0,1} bf16, scale applied here in f32
    x = x_ref[...] * (mask_ref[...].astype(jnp.float32) * jnp.float32(inv_keep))
    h = _relu(_lin(x, w1, b1))
    h = _relu(_lin(h, w2, b2))
    h = _relu(_lin(h, w3, b3))
    h = _relu(_lin(h, w4, b4))

    h4 = h.astype(h4_ref.dtype)          # bf16 carried to HBM
    h4_ref[...] = h4

    # BN partial statistics, consistent with the (bf16-rounded) h4 the decoder reads.
    hf = h4.astype(jnp.float32)
    psum = jnp.sum(hf, axis=0, keepdims=True)          # (1, fc_pad)
    pssq = jnp.sum(hf * hf, axis=0, keepdims=True)     # (1, fc_pad)
    rows = jax.lax.broadcasted_iota(jnp.int32, (STATS_ROWS, hf.shape[1]), 0)
    stats = jnp.where(rows == 0, psum, jnp.where(rows == 1, pssq, 0.0))
    stats_ref[0] = stats                                # (STATS_ROWS, fc_pad)


# ---------------------------------------------------------------------------
# Kernel B: BN apply + mu/var heads + reparameterize + decoder.
# Grid over batch tiles, "parallel".
# NOTE: matches the PyTorch module's asymmetry: mu uses BatchNorm'd h4,
#       var uses raw h4.
# ---------------------------------------------------------------------------
def _decoder_kernel(h4_ref, mean_ref, istd_ref, eps_ref,
                    w51, b51, w52, b52,
                    w6, b6, w7, b7, w8, b8, w9, b9, w10, b10,
                    recon_ref, mu_ref, var_ref):
    h4 = h4_ref[...].astype(jnp.float32)
    h4n = (h4 - mean_ref[...]) * istd_ref[...]

    mu = _lin(h4n, w51, b51)
    var = jax.nn.sigmoid(_lin(h4, w52, b52))

    z = mu + eps_ref[...].astype(jnp.float32) * jnp.sqrt(var)

    h = _relu(_lin(z, w6, b6))
    h = _relu(_lin(h, w7, b7))
    h = _relu(_lin(h, w8, b8))
    h = _relu(_lin(h, w9, b9))
    recon = _relu(_lin(h, w10, b10))

    recon_ref[...] = recon.astype(recon_ref.dtype)
    mu_ref[...] = mu.astype(mu_ref.dtype)
    var_ref[...] = var.astype(var_ref.dtype)


# ---------------------------------------------------------------------------
# Wrapper helpers
# ---------------------------------------------------------------------------
_ENC_PARAMS = ("w1", "b1", "w2", "b2", "w3", "b3", "w4", "b4")
_DEC_PARAMS = ("w51", "b51", "w52", "b52",
               "w6", "b6", "w7", "b7", "w8", "b8", "w9", "b9", "w10", "b10")


def _pick_tile_b(B):
    # Largest tile (<=256, multiple of 8) dividing B that still gives >= 2 grid
    # steps, so the "parallel" batch axis can shard across both v7x TCs.
    for t in (256, 128, 64, 32, 16, 8):
        if B % t == 0 and B // t >= 2:
            return t
    for t in (256, 128, 64, 32, 16, 8):   # fall back to a single grid step
        if B % t == 0:
            return t
    raise ValueError("batch must be a multiple of 8 (sublane)")


def _compiler_params():
    # Generation-aware VMEM limit: ~75% of physical, capped at 100 MiB
    # (v5e/v6e: ~96 MiB of 128 MiB; v7x: 48 MiB of 64 MiB).
    try:
        cap = int(pltpu.get_tpu_info().vmem_capacity_bytes)
        limit = max(32 * 1024 * 1024, min(int(cap * 0.75), 100 * 1024 * 1024))
    except Exception:
        limit = 48 * 1024 * 1024
    return pltpu.CompilerParams(dimension_semantics=("parallel",),
                                vmem_limit_bytes=limit)


def _cost(batch, matmul_kns, transcendentals, arrays, extra_bytes=0):
    flops = 2 * batch * sum(k * n for k, n in matmul_kns)
    nbytes = sum(int(a.size) * a.dtype.itemsize for a in arrays) + int(extra_bytes)
    return pl.CostEstimate(flops=flops, transcendentals=int(transcendentals),
                           bytes_accessed=nbytes)


def _make_rng(key, B, in_dim, latent_dim, p_drop):
    # Host-side RNG (distribution-matching replacement for torch dropout /
    # torch.randn_like).  bf16 streams to minimize DMA.
    k_drop, k_eps = jax.random.split(key)
    if p_drop > 0.0:
        keep = jax.random.bernoulli(k_drop, 1.0 - p_drop, (B, in_dim))
        mask = keep.astype(jnp.bfloat16)
    else:
        mask = jnp.ones((B, in_dim), jnp.bfloat16)
    eps = jax.random.normal(k_eps, (B, latent_dim), jnp.float32).astype(jnp.bfloat16)
    return mask, eps


# ---------------------------------------------------------------------------
# Forward
# ---------------------------------------------------------------------------
def vae_forward(x, params, key, p_drop, latent_dim, out_dim):
    B, in_dim = x.shape
    in_pad = params["w1"].shape[0]
    fc_pad = params["w1"].shape[1]
    lat_pad = params["w51"].shape[1]
    out_pad = params["w10"].shape[1]

    assert B % SUBLANE == 0, "batch must be a multiple of 8 (sublane)"
    tile_b = _pick_tile_b(B)
    n_tiles = B // tile_b
    grid = (n_tiles,)

    mask, eps = _make_rng(key, B, in_dim, latent_dim, p_drop)
    inv_keep = 1.0 / (1.0 - p_drop) if p_drop > 0.0 else 1.0

    # lane-dense zero-padded inputs
    x_p = jnp.zeros((B, in_pad), jnp.float32).at[:, :in_dim].set(x.astype(jnp.float32))
    mask_p = jnp.zeros((B, in_pad), jnp.bfloat16).at[:, :in_dim].set(mask)
    eps_p = jnp.zeros((B, lat_pad), jnp.bfloat16).at[:, :latent_dim].set(eps)

    def row(d):
        return pl.BlockSpec((tile_b, d), lambda i: (i, 0))

    def const(shape):
        return pl.BlockSpec(shape, lambda i: (0, 0))

    enc_params = [params[k] for k in _ENC_PARAMS]
    dec_params = [params[k] for k in _DEC_PARAMS]
    cparams = _compiler_params()

    # ---- kernel A: encoder front -> h4 (bf16) + per-tile BN partial stats ----
    h4, stats = pl.pallas_call(
        functools.partial(_encoder_kernel, inv_keep=inv_keep),
        grid=grid,
        in_specs=[row(in_pad), row(in_pad)] + [const(p.shape) for p in enc_params],
        out_specs=(row(fc_pad),
                   pl.BlockSpec((1, STATS_ROWS, fc_pad), lambda i: (i, 0, 0))),
        out_shape=(jax.ShapeDtypeStruct((B, fc_pad), jnp.bfloat16),
                   jax.ShapeDtypeStruct((n_tiles, STATS_ROWS, fc_pad), jnp.float32)),
        compiler_params=cparams,
        cost_estimate=_cost(
            B, [(in_pad, fc_pad)] + [(fc_pad, fc_pad)] * 3, 0,
            [x_p, mask_p] + enc_params,
            extra_bytes=B * fc_pad * 2 + n_tiles * STATS_ROWS * fc_pad * 4),
    )(x_p, mask_p, *enc_params)

    # ---- tiny wrapper-side reduction of the partial BN statistics ----
    psum = jnp.sum(stats[:, 0, :], axis=0, keepdims=True)      # (1, fc_pad)
    pssq = jnp.sum(stats[:, 1, :], axis=0, keepdims=True)      # (1, fc_pad)
    mean = psum * jnp.float32(1.0 / B)
    var_b = jnp.maximum(pssq * jnp.float32(1.0 / B) - mean * mean, 0.0)
    istd = jax.lax.rsqrt(var_b + jnp.float32(1e-10))
    # NOTE: padded feature columns have mean=var=0 -> h4n is exactly 0 there.

    # ---- kernel B: BN apply + heads + reparameterize + decoder ----
    recon, mu, var = pl.pallas_call(
        _decoder_kernel,
        grid=grid,
        in_specs=[row(fc_pad), const((1, fc_pad)), const((1, fc_pad)), row(lat_pad)]
                 + [const(p.shape) for p in dec_params],
        out_specs=(row(out_pad), row(lat_pad), row(lat_pad)),
        out_shape=(jax.ShapeDtypeStruct((B, out_pad), jnp.float32),
                   jax.ShapeDtypeStruct((B, lat_pad), jnp.float32),
                   jax.ShapeDtypeStruct((B, lat_pad), jnp.float32)),
        compiler_params=cparams,
        cost_estimate=_cost(
            B,
            [(fc_pad, lat_pad)] * 2 + [(lat_pad, fc_pad)]
            + [(fc_pad, fc_pad)] * 3 + [(fc_pad, out_pad)],
            2 * B * lat_pad,  # sigmoid + sqrt
            [h4, mean, istd, eps_p] + dec_params,
            extra_bytes=B * (out_pad + 2 * lat_pad) * 4),
    )(h4, mean, istd, eps_p, *dec_params)

    # slice lane-padded outputs back to the module's shapes
    return recon[:, :out_dim], mu[:, :latent_dim], var[:, :latent_dim]


# ---------------------------------------------------------------------------
# Deterministic PyTorch-style init, stored pre-transposed (in, out), zero-padded
# to lane multiples.  Weights in bf16 (MXU operands), biases in f32.
# ---------------------------------------------------------------------------
def init_vae_params(key, in_dim, fc_dim, latent_dim, out_dim,
                    weight_dtype=jnp.bfloat16):
    layer_shapes = {
        "1": (in_dim, fc_dim), "2": (fc_dim, fc_dim), "3": (fc_dim, fc_dim),
        "4": (fc_dim, fc_dim), "51": (fc_dim, latent_dim), "52": (fc_dim, latent_dim),
        "6": (latent_dim, fc_dim), "7": (fc_dim, fc_dim), "8": (fc_dim, fc_dim),
        "9": (fc_dim, fc_dim), "10": (fc_dim, out_dim),
    }
    params = {}
    for name, (fan_in, fan_out) in layer_shapes.items():
        key, kw, kb = jax.random.split(key, 3)
        bound = 1.0 / float(fan_in) ** 0.5
        w = jax.random.uniform(kw, (fan_in, fan_out), jnp.float32, -bound, bound)
        b = jax.random.uniform(kb, (1, fan_out), jnp.float32, -bound, bound)
        fi_p, fo_p = _round_up(fan_in, LANE), _round_up(fan_out, LANE)
        w_p = jnp.zeros((fi_p, fo_p), jnp.float32).at[:fan_in, :fan_out].set(w)
        b_p = jnp.zeros((1, fo_p), jnp.float32).at[:, :fan_out].set(b)
        params[f"w{name}"] = w_p.astype(weight_dtype)
        params[f"b{name}"] = b_p                      # keep bias / elementwise f32
    return params


# ---------------------------------------------------------------------------
# Pure-JAX reference (same padded params, same bf16 rounding points)
# ---------------------------------------------------------------------------
def _ref_forward(x_p, mask_p, eps_p, params, inv_keep):
    def lin(h, wn, bn):
        return jnp.dot(h.astype(jnp.bfloat16), params[wn],
                       preferred_element_type=jnp.float32) + params[bn]

    def relu(v):
        return jnp.maximum(v, 0.0)

    h = x_p * (mask_p.astype(jnp.float32) * jnp.float32(inv_keep))
    h = relu(lin(h, "w1", "b1"))
    h = relu(lin(h, "w2", "b2"))
    h = relu(lin(h, "w3", "b3"))
    h4 = relu(lin(h, "w4", "b4")).astype(jnp.bfloat16).astype(jnp.float32)

    mean = jnp.mean(h4, axis=0, keepdims=True)
    varb = jnp.maximum(jnp.mean(h4 * h4, axis=0, keepdims=True) - mean * mean, 0.0)
    h4n = (h4 - mean) * jax.lax.rsqrt(varb + jnp.float32(1e-10))

    mu = lin(h4n, "w51", "b51")
    var = jax.nn.sigmoid(lin(h4, "w52", "b52"))
    z = mu + eps_p.astype(jnp.float32) * jnp.sqrt(var)

    h = relu(lin(z, "w6", "b6"))
    h = relu(lin(h, "w7", "b7"))
    h = relu(lin(h, "w8", "b8"))
    h = relu(lin(h, "w9", "b9"))
    recon = relu(lin(h, "w10", "b10"))
    return recon, mu, var


if __name__ == "__main__":
    B, in_dim, fc_dim, latent_dim, out_dim = 16, 32, 64, 16, 32
    p_drop = 0.1

    key = jax.random.PRNGKey(0)
    k_param, k_x, k_rng = jax.random.split(key, 3)
    x = jax.random.normal(k_x, (B, in_dim), dtype=jnp.float32)
    params = init_vae_params(k_param, in_dim, fc_dim, latent_dim, out_dim)

    recon, mu, var = vae_forward(x, params, k_rng, p_drop, latent_dim, out_dim)
    jax.block_until_ready((recon, mu, var))

    # ---- reference check (same RNG draws, same padded params) ----
    in_pad = params["w1"].shape[0]
    lat_pad = params["w51"].shape[1]
    mask, eps = _make_rng(k_rng, B, in_dim, latent_dim, p_drop)
    x_p = jnp.zeros((B, in_pad), jnp.float32).at[:, :in_dim].set(x)
    mask_p = jnp.zeros((B, in_pad), jnp.bfloat16).at[:, :in_dim].set(mask)
    eps_p = jnp.zeros((B, lat_pad), jnp.bfloat16).at[:, :latent_dim].set(eps)
    inv_keep = 1.0 / (1.0 - p_drop)
    r_r, mu_r, var_r = _ref_forward(x_p, mask_p, eps_p, params, inv_keep)
    r_r, mu_r, var_r = (r_r[:, :out_dim], mu_r[:, :latent_dim], var_r[:, :latent_dim])

    assert recon.shape == (B, out_dim)
    assert mu.shape == (B, latent_dim)
    assert var.shape == (B, latent_dim)
    assert bool(jnp.all(jnp.isfinite(recon)))
    assert bool(jnp.all(jnp.isfinite(mu)))
    assert bool(jnp.all(recon >= 0.0))                       # final ReLU
    assert bool(jnp.all((var >= 0.0) & (var <= 1.0)))        # sigmoid range
    assert bool(jnp.allclose(recon, r_r, rtol=2e-2, atol=2e-2))
    assert bool(jnp.allclose(mu, mu_r, rtol=2e-2, atol=2e-2))
    assert bool(jnp.allclose(var, var_r, rtol=2e-2, atol=2e-2))
    print("KERNEL_OK")
</pallas_src>

<mosaic_0001>
module attributes {stable_mosaic.version = 11 : i64} {
  func.func @_encoder_kernel(%arg0: i32, %arg1: memref<8x128xf32, #tpu.memory_space<vmem>>, %arg2: memref<8x128xbf16, #tpu.memory_space<vmem>>, %arg3: memref<128x128xbf16, #tpu.memory_space<vmem>>, %arg4: memref<1x128xf32, #tpu.memory_space<vmem>>, %arg5: memref<128x128xbf16, #tpu.memory_space<vmem>>, %arg6: memref<1x128xf32, #tpu.memory_space<vmem>>, %arg7: memref<128x128xbf16, #tpu.memory_space<vmem>>, %arg8: memref<1x128xf32, #tpu.memory_space<vmem>>, %arg9: memref<128x128xbf16, #tpu.memory_space<vmem>>, %arg10: memref<1x128xf32, #tpu.memory_space<vmem>>, %arg11: memref<8x128xbf16, #tpu.memory_space<vmem>>, %arg12: memref<1x8x128xf32, #tpu.memory_space<vmem>>) attributes {dimension_semantics = [#tpu.dimension_semantics<parallel>], iteration_bounds = array<i64: 2>, scalar_prefetch = 0 : i64, scratch_operands = 0 : i64, tpu.core_type = #tpu.core_type<tc>, window_params = [{transform_indices = @transform_0, window_bounds = array<i64: 8, 128>}, {transform_indices = @transform_1, window_bounds = array<i64: 8, 128>}, {pipeline_mode = #tpu.pipeline_mode<synchronous>, transform_indices = @transform_2, window_bounds = array<i64: 128, 128>}, {pipeline_mode = #tpu.pipeline_mode<synchronous>, transform_indices = @transform_3, window_bounds = array<i64: 1, 128>}, {pipeline_mode = #tpu.pipeline_mode<synchronous>, transform_indices = @transform_4, window_bounds = array<i64: 128, 128>}, {pipeline_mode = #tpu.pipeline_mode<synchronous>, transform_indices = @transform_5, window_bounds = array<i64: 1, 128>}, {pipeline_mode = #tpu.pipeline_mode<synchronous>, transform_indices = @transform_6, window_bounds = array<i64: 128, 128>}, {pipeline_mode = #tpu.pipeline_mode<synchronous>, transform_indices = @transform_7, window_bounds = array<i64: 1, 128>}, {pipeline_mode = #tpu.pipeline_mode<synchronous>, transform_indices = @transform_8, window_bounds = array<i64: 128, 128>}, {pipeline_mode = #tpu.pipeline_mode<synchronous>, transform_indices = @transform_9, window_bounds = array<i64: 1, 128>}, {transform_indices = @transform_10, window_bounds = array<i64: 8, 128>}, {transform_indices = @transform_11, window_bounds = array<i64: 1, 8, 128>}]} {
    %c0 = arith.constant 0 : index
    %c0_0 = arith.constant 0 : index
    %0 = vector.load %arg1[%c0, %c0_0] : memref<8x128xf32, #tpu.memory_space<vmem>>, vector<8x128xf32>
    %c0_1 = arith.constant 0 : index
    %c0_2 = arith.constant 0 : index
    %1 = vector.load %arg2[%c0_1, %c0_2] : memref<8x128xbf16, #tpu.memory_space<vmem>>, vector<8x128xbf16>
    %2 = arith.extf %1 : vector<8x128xbf16> to vector<8x128xf32>
    %cst = arith.constant 1.11111116 : f32
    %3 = vector.broadcast %cst : f32 to vector<8x128xf32>
    %4 = arith.mulf %2, %3 : vector<8x128xf32>
    %5 = arith.mulf %0, %4 : vector<8x128xf32>
    %6 = arith.truncf %5 : vector<8x128xf32> to vector<8x128xbf16>
    %c0_3 = arith.constant 0 : index
    %c0_4 = arith.constant 0 : index
    %7 = vector.load %arg3[%c0_3, %c0_4] : memref<128x128xbf16, #tpu.memory_space<vmem>>, vector<128x128xbf16>
    %cst_5 = arith.constant dense<0.000000e+00> : vector<8x128xf32>
    %8 = tpu.matmul %6, %7, %cst_5 {dimension_numbers = #tpu.dot_dimension_numbers<[1], [0], [0], [1], [0, 0, 1, 1], [], []>} : vector<8x128xbf16>, vector<128x128xbf16>, vector<8x128xf32> -> vector<8x128xf32>
    %c0_6 = arith.constant 0 : index
    %c0_7 = arith.constant 0 : index
    %9 = vector.load %arg4[%c0_6, %c0_7] : memref<1x128xf32, #tpu.memory_space<vmem>>, vector<1x128xf32>
    %10 = vector.broadcast %9 : vector<1x128xf32> to vector<8x128xf32>
    %11 = arith.addf %8, %10 : vector<8x128xf32>
    %cst_8 = arith.constant 0.000000e+00 : f32
    %12 = vector.broadcast %cst_8 : f32 to vector<8x128xf32>
    %13 = arith.maximumf %11, %12 : vector<8x128xf32>
    %14 = arith.truncf %13 : vector<8x128xf32> to vector<8x128xbf16>
    %c0_9 = arith.constant 0 : index
    %c0_10 = arith.constant 0 : index
    %15 = vector.load %arg5[%c0_9, %c0_10] : memref<128x128xbf16, #tpu.memory_space<vmem>>, vector<128x128xbf16>
    %cst_11 = arith.constant dense<0.000000e+00> : vector<8x128xf32>
    %16 = tpu.matmul %14, %15, %cst_11 {dimension_numbers = #tpu.dot_dimension_numbers<[1], [0], [0], [1], [0, 0, 1, 1], [], []>} : vector<8x128xbf16>, vector<128x128xbf16>, vector<8x128xf32> -> vector<8x128xf32>
    %c0_12 = arith.constant 0 : index
    %c0_13 = arith.constant 0 : index
    %17 = vector.load %arg6[%c0_12, %c0_13] : memref<1x128xf32, #tpu.memory_space<vmem>>, vector<1x128xf32>
    %18 = vector.broadcast %17 : vector<1x128xf32> to vector<8x128xf32>
    %19 = arith.addf %16, %18 : vector<8x128xf32>
    %cst_14 = arith.constant 0.000000e+00 : f32
    %20 = vector.broadcast %cst_14 : f32 to vector<8x128xf32>
    %21 = arith.maximumf %19, %20 : vector<8x128xf32>
    %22 = arith.truncf %21 : vector<8x128xf32> to vector<8x128xbf16>
    %c0_15 = arith.constant 0 : index
    %c0_16 = arith.constant 0 : index
    %23 = vector.load %arg7[%c0_15, %c0_16] : memref<128x128xbf16, #tpu.memory_space<vmem>>, vector<128x128xbf16>
    %cst_17 = arith.constant dense<0.000000e+00> : vector<8x128xf32>
    %24 = tpu.matmul %22, %23, %cst_17 {dimension_numbers = #tpu.dot_dimension_numbers<[1], [0], [0], [1], [0, 0, 1, 1], [], []>} : vector<8x128xbf16>, vector<128x128xbf16>, vector<8x128xf32> -> vector<8x128xf32>
    %c0_18 = arith.constant 0 : index
    %c0_19 = arith.constant 0 : index
    %25 = vector.load %arg8[%c0_18, %c0_19] : memref<1x128xf32, #tpu.memory_space<vmem>>, vector<1x128xf32>
    %26 = vector.broadcast %25 : vector<1x128xf32> to vector<8x128xf32>
    %27 = arith.addf %24, %26 : vector<8x128xf32>
    %cst_20 = arith.constant 0.000000e+00 : f32
    %28 = vector.broadcast %cst_20 : f32 to vector<8x128xf32>
    %29 = arith.maximumf %27, %28 : vector<8x128xf32>
    %30 = arith.truncf %29 : vector<8x128xf32> to vector<8x128xbf16>
    %c0_21 = arith.constant 0 : index
    %c0_22 = arith.constant 0 : index
    %31 = vector.load %arg9[%c0_21, %c0_22] : memref<128x128xbf16, #tpu.memory_space<vmem>>, vector<128x128xbf16>
    %cst_23 = arith.constant dense<0.000000e+00> : vector<8x128xf32>
    %32 = tpu.matmul %30, %31, %cst_23 {dimension_numbers = #tpu.dot_dimension_numbers<[1], [0], [0], [1], [0, 0, 1, 1], [], []>} : vector<8x128xbf16>, vector<128x128xbf16>, vector<8x128xf32> -> vector<8x128xf32>
    %c0_24 = arith.constant 0 : index
    %c0_25 = arith.constant 0 : index
    %33 = vector.load %arg10[%c0_24, %c0_25] : memref<1x128xf32, #tpu.memory_space<vmem>>, vector<1x128xf32>
    %34 = vector.broadcast %33 : vector<1x128xf32> to vector<8x128xf32>
    %35 = arith.addf %32, %34 : vector<8x128xf32>
    %cst_26 = arith.constant 0.000000e+00 : f32
    %36 = vector.broadcast %cst_26 : f32 to vector<8x128xf32>
    %37 = arith.maximumf %35, %36 : vector<8x128xf32>
    %38 = arith.truncf %37 : vector<8x128xf32> to vector<8x128xbf16>
    %c0_27 = arith.constant 0 : index
    %c0_28 = arith.constant 0 : index
    %39 = vector.load %arg11[%c0_27, %c0_28] : memref<8x128xbf16, #tpu.memory_space<vmem>>, vector<8x128xbf16>
    tpu.vector_store %arg11[%c0_27, %c0_28], %38 {strides = array<i32>} : memref<8x128xbf16, #tpu.memory_space<vmem>>, vector<8x128xbf16>,
    %40 = arith.extf %38 : vector<8x128xbf16> to vector<8x128xf32>
    %cst_29 = arith.constant dense<0.000000e+00> : vector<128xf32>
    %41 = vector.multi_reduction <add>, %40, %cst_29 [0] : vector<8x128xf32> to vector<128xf32>
    %42 = vector.shape_cast %41 : vector<128xf32> to vector<1x128xf32>
    %43 = arith.mulf %40, %40 : vector<8x128xf32>
    %cst_30 = arith.constant dense<0.000000e+00> : vector<128xf32>
    %44 = vector.multi_reduction <add>, %43, %cst_30 [0] : vector<8x128xf32> to vector<128xf32>
    %45 = vector.shape_cast %44 : vector<128xf32> to vector<1x128xf32>
    %46 = tpu.iota {dimensions = array<i32: 0>} : vector<8x128xi32>
    %c0_i32 = arith.constant 0 : i32
    %47 = vector.broadcast %c0_i32 : i32 to vector<8x128xi32>
    %48 = arith.cmpi eq, %46, %47 : vector<8x128xi32>
    %c1_i32 = arith.constant 1 : i32
    %49 = vector.broadcast %c1_i32 : i32 to vector<8x128xi32>
    %50 = arith.cmpi eq, %46, %49 : vector<8x128xi32>
    %cst_31 = arith.constant 0.000000e+00 : f32
    %51 = vector.shape_cast %45 : vector<1x128xf32> to vector<1x128xf32>
    %52 = vector.broadcast %51 : vector<1x128xf32> to vector<8x128xf32>
    %53 = vector.broadcast %cst_31 : f32 to vector<8x128xf32>
    %54 = arith.select %50, %52, %53 : vector<8x128xi1>, vector<8x128xf32>
    %55 = vector.shape_cast %42 : vector<1x128xf32> to vector<1x128xf32>
    %56 = vector.broadcast %55 : vector<1x128xf32> to vector<8x128xf32>
    %57 = arith.select %48, %56, %54 : vector<8x128xi1>, vector<8x128xf32>
    %c0_32 = arith.constant 0 : index
    %c0_33 = arith.constant 0 : index
    %c0_34 = arith.constant 0 : index
    %58 = vector.load %arg12[%c0_32, %c0_33, %c0_34] : memref<1x8x128xf32, #tpu.memory_space<vmem>>, vector<1x8x128xf32>
    %59 = vector.shape_cast %58 : vector<1x8x128xf32> to vector<8x128xf32>
    %60 = vector.shape_cast %57 : vector<8x128xf32> to vector<1x8x128xf32>
    tpu.vector_store %arg12[%c0_32, %c0_33, %c0_34], %60 {strides = array<i32>} : memref<1x8x128xf32, #tpu.memory_space<vmem>>, vector<1x8x128xf32>,
    return
  }
  func.func @transform_0(%arg0: i32) -> (i32, i32) {
    %c0_i32 = arith.constant 0 : i32
    %c0_i32_0 = arith.constant 0 : i32
    return %arg0, %c0_i32 : i32, i32
  }
  func.func @transform_1(%arg0: i32) -> (i32, i32) {
    %c0_i32 = arith.constant 0 : i32
    %c0_i32_0 = arith.constant 0 : i32
    return %arg0, %c0_i32 : i32, i32
  }
  func.func @transform_2(%arg0: i32) -> (i32, i32) {
    %c0_i32 = arith.constant 0 : i32
    %c0_i32_0 = arith.constant 0 : i32
    %c0_i32_1 = arith.constant 0 : i32
    return %c0_i32, %c0_i32_0 : i32, i32
  }
  func.func @transform_3(%arg0: i32) -> (i32, i32) {
    %c0_i32 = arith.constant 0 : i32
    %c0_i32_0 = arith.constant 0 : i32
    %c0_i32_1 = arith.constant 0 : i32
    return %c0_i32, %c0_i32_0 : i32, i32
  }
  func.func @transform_4(%arg0: i32) -> (i32, i32) {
    %c0_i32 = arith.constant 0 : i32
    %c0_i32_0 = arith.constant 0 : i32
    %c0_i32_1 = arith.constant 0 : i32
    return %c0_i32, %c0_i32_0 : i32, i32
  }
  func.func @transform_5(%arg0: i32) -> (i32, i32) {
    %c0_i32 = arith.constant 0 : i32
    %c0_i32_0 = arith.constant 0 : i32
    %c0_i32_1 = arith.constant 0 : i32
    return %c0_i32, %c0_i32_0 : i32, i32
  }
  func.func @transform_6(%arg0: i32) -> (i32, i32) {
    %c0_i32 = arith.constant 0 : i32
    %c0_i32_0 = arith.constant 0 : i32
    %c0_i32_1 = arith.constant 0 : i32
    return %c0_i32, %c0_i32_0 : i32, i32
  }
  func.func @transform_7(%arg0: i32) -> (i32, i32) {
    %c0_i32 = arith.constant 0 : i32
    %c0_i32_0 = arith.constant 0 : i32
    %c0_i32_1 = arith.constant 0 : i32
    return %c0_i32, %c0_i32_0 : i32, i32
  }
  func.func @transform_8(%arg0: i32) -> (i32, i32) {
    %c0_i32 = arith.constant 0 : i32
    %c0_i32_0 = arith.constant 0 : i32
    %c0_i32_1 = arith.constant 0 : i32
    return %c0_i32, %c0_i32_0 : i32, i32
  }
  func.func @transform_9(%arg0: i32) -> (i32, i32) {
    %c0_i32 = arith.constant 0 : i32
    %c0_i32_0 = arith.constant 0 : i32
    %c0_i32_1 = arith.constant 0 : i32
    return %c0_i32, %c0_i32_0 : i32, i32
  }
  func.func @transform_10(%arg0: i32) -> (i32, i32) {
    %c0_i32 = arith.constant 0 : i32
    %c0_i32_0 = arith.constant 0 : i32
    return %arg0, %c0_i32 : i32, i32
  }
  func.func @transform_11(%arg0: i32) -> (i32, i32, i32) {
    %c0_i32 = arith.constant 0 : i32
    %c0_i32_0 = arith.constant 0 : i32
    %c0_i32_1 = arith.constant 0 : i32
    return %arg0, %c0_i32, %c0_i32_0 : i32, i32, i32
  }
}

</mosaic_0001>

<llo_original>
// kernel: tpu_custom_call.1
$region0: #{tpu_custom_call.1}
  #allocation0 [shape = 'u32[]', space=smem, size = 0x4, offset = 0x4, fixed_abs, tag = 'smem constant byte address 0x4 - core index']
  #allocation1 [shape = 'u32[144,128]{1,0:T(1,128)}', space=vmem, size = 0x12000, scoped, tag = 'internal scratch']
  %s0 = inlined_call_operand.hbm [shape: f32[16,128], index: 0, kind: input, shape index: {}]
  %s1 = inlined_call_operand.hbm [shape: bf16[16,128], index: 1, kind: input, shape index: {}]
  %s2 = inlined_call_operand.hbm [shape: bf16[128,128], index: 2, kind: input, shape index: {}]
  %s3 = inlined_call_operand.vmem [shape: f32[1,128], index: 3, kind: input, shape index: {}]
  %s4 = inlined_call_operand.hbm [shape: bf16[128,128], index: 4, kind: input, shape index: {}]
  %s5 = inlined_call_operand.vmem [shape: f32[1,128], index: 5, kind: input, shape index: {}]
  %s6 = inlined_call_operand.hbm [shape: bf16[128,128], index: 6, kind: input, shape index: {}]
  %s7 = inlined_call_operand.vmem [shape: f32[1,128], index: 7, kind: input, shape index: {}]
  %s8 = inlined_call_operand.hbm [shape: bf16[128,128], index: 8, kind: input, shape index: {}]
  %s9 = inlined_call_operand.vmem [shape: f32[1,128], index: 9, kind: input, shape index: {}]
  %s10 = inlined_call_operand.hbm [shape: bf16[16,128], index: 10, kind: output, shape index: {0}]
  %s11 = inlined_call_operand.hbm [shape: f32[2,8,128], index: 11, kind: output, shape index: {1}]
  %12 = xla_tuple %s10, %s11
  %s13 = sld [smem:[#allocation0]]
  $region105: #{tpu_custom_call.1} parent=0
    _
  %s15 = ssub.s32 1, %s13
  %s16 = scalar_select 0, %s15, %s13
  $region1: #{tpu_custom_call.1} parent=0
    #allocation2 [shape = 'u8[8192]{0}', space=vmem, size = 0x2000, scoped, tag = 'input window, operand 0']
    #allocation3 [shape = 's32[2]{0}', space=sflag, size = 0x8, scoped, tag = 'scoped memory for tpu_custom_call.1']
    #allocation4 [shape = 's32[2]{0}', space=sflag, size = 0x8, scoped, tag = 'scoped memory for tpu_custom_call.1']
    #allocation5 [shape = 'u8[4096]{0}', space=vmem, size = 0x1000, scoped, tag = 'input window, operand 1']
    #allocation6 [shape = 's32[2]{0}', space=sflag, size = 0x8, scoped, tag = 'scoped memory for tpu_custom_call.1']
    #allocation7 [shape = 'u8[32768]{0}', space=vmem, size = 0x8000, scoped, tag = 'input window, operand 2, single buffered']
    #allocation8 [shape = 'u8[32768]{0}', space=vmem, size = 0x8000, scoped, tag = 'input window, operand 4, single buffered']
    #allocation9 [shape = 's32[1]{0}', space=sflag, size = 0x4, scoped, tag = 'scoped memory for tpu_custom_call.1']
    #allocation10 [shape = 'u8[32768]{0}', space=vmem, size = 0x8000, scoped, tag = 'input window, operand 6, single buffered']
    #allocation11 [shape = 'u8[32768]{0}', space=vmem, size = 0x8000, scoped, tag = 'input window, operand 8, single buffered']
    #allocation12 [shape = 's32[1]{0}', space=sflag, size = 0x4, scoped, tag = 'scoped memory for tpu_custom_call.1']
    #allocation13 [shape = 'u8[4096]{0}', space=vmem, size = 0x1000, scoped, tag = 'output window, operand 0']
    #allocation14 [shape = 'u8[8192]{0}', space=vmem, size = 0x2000, scoped, tag = 'output window, operand 1']
    #allocation15 [shape = 's32[2]{0}', space=sflag, size = 0x8, scoped, tag = 'scoped memory for tpu_custom_call.1']
    %17 = vsyncpa [#allocation3], 0
    %s18 = scalar_lea.sflag [#allocation3], 1
    %19 = vsyncpa %s18, 0
    %20 = vsyncpa [#allocation6], 0
    %s21 = scalar_lea.sflag [#allocation6], 1
    %22 = vsyncpa %s21, 0
    %23 = vsyncpa [#allocation9], 0
    %24 = vsyncpa [#allocation12], 0
    %25 = vsyncpa [#allocation4], 0
    %s26 = scalar_lea.sflag [#allocation4], 1
    %27 = vsyncpa %s26, 0
    %28 = vsyncpa [#allocation15], 0
    %s29 = scalar_lea.sflag [#allocation15], 1
    %30 = vsyncpa %s29, 0
    loop: start=0, step=1, limit=4
    $region2: #{tpu_custom_call.1} parent=1 // loop_pre_header
      _
    $region3: #{tpu_custom_call.1} parent=1 // loop_header
      %s32 = sphi 0, %s36
      %p33 = scmp.ge.s32.totalorder %s32, 4
      %s42 = sphi 0, %s44
      %s45 = sphi 0, %s42
      %s46 = sphi 0, %s45
      %s62 = sphi 0, %s46
      %s68 = sphi 0, %s70
      %s71 = sphi 0, %s68
      %s72 = sphi 0, %s71
      %s88 = sphi 0, %s72
      %s92 = sphi 0, %s92
      %s94 = sphi 0, %s92
      %s95 = sphi 0, %s94
      %s109 = sphi 0, %s95
      %s113 = sphi 0, %s113
      %s115 = sphi 0, %s113
      %s116 = sphi 0, %s115
      %s130 = sphi 0, %s116
      %s134 = sphi 0, %s134
      %s136 = sphi 0, %s134
      %s137 = sphi 0, %s136
      %s151 = sphi 0, %s137
      %s155 = sphi 0, %s155
      %s157 = sphi 0, %s155
      %s158 = sphi 0, %s157
      %s172 = sphi 0, %s158
      %s176 = sphi 0, %s176
      %s178 = sphi 0, %s176
      %s179 = sphi 0, %s178
      %s193 = sphi 0, %s179
      %s197 = sphi 0, %s197
      %s199 = sphi 0, %s197
      %s200 = sphi 0, %s199
      %s214 = sphi 0, %s200
      %s218 = sphi 0, %s218
      %s220 = sphi 0, %s218
      %s221 = sphi 0, %s220
      %s235 = sphi 0, %s221
      %s239 = sphi 0, %s239
      %s241 = sphi 0, %s239
      %s242 = sphi 0, %s241
      %s256 = sphi 0, %s242
      %s262 = sphi 0, %s264
      %s265 = sphi 0, %s262
      %s266 = sphi 0, %s265
      %s282 = sphi 0, %s266
      %s288 = sphi 0, %s290
      %s291 = sphi 0, %s288
      %s292 = sphi 0, %s291
      %s308 = sphi 0, %s292
    $region4: #{tpu_custom_call.1} parent=1 // loop_header_branch
      %35 = sbr.rel (%p33) target = $region8
    $region5: #{tpu_custom_call.1} parent=1 // loop_body
      %s37 = ssub.s32 %s32, 1
      %s38 = ssub.s32 %s32, 2
      %s39 = sadd.s32 %s32, 1
      %s40 = ssub.s32 %s32, %s39
      %p41 = scmp.eq.s32.totalorder %s40, 0
      %s43 = sadd.s32 %s42, 1
      %s44 = scalar_select %p41, %s42, %s43
      %p47 = pneg %p41
      %p48 = scmp.eq.s32.totalorder %s32, 1
      %p49 = por %p47, %p48
      %p50 = scmp.ne.s32.totalorder %s42, %s45
      %p51 = scmp.eq.s32.totalorder %s32, 0
      %p52 = por %p50, %p51
      %p53 = scmp.ne.s32.totalorder %s42, %s45
      %p54 = scmp.eq.s32.totalorder %s37, 1
      %p55 = por %p53, %p54
      %p56 = scmp.ne.s32.totalorder %s45, %s46
      %p57 = scmp.eq.s32.totalorder %s37, 0
      %p58 = por %p56, %p57
      %p59 = scmp.ne.s32.totalorder %s45, %s46
      %p60 = scmp.eq.s32.totalorder %s38, 1
      %p61 = por %p59, %p60
      %p63 = scmp.ne.s32.totalorder %s46, %s62
      %p64 = scmp.eq.s32.totalorder %s38, 0
      %p65 = por %p63, %p64
      %s66 = ssub.s32 %s32, %s39
      %p67 = scmp.eq.s32.totalorder %s66, 0
      %s69 = sadd.s32 %s68, 1
      %s70 = scalar_select %p67, %s68, %s69
      %p73 = pneg %p67
      %p74 = scmp.eq.s32.totalorder %s32, 1
      %p75 = por %p73, %p74
      %p76 = scmp.ne.s32.totalorder %s68, %s71
      %p77 = scmp.eq.s32.totalorder %s32, 0
      %p78 = por %p76, %p77
      %p79 = scmp.ne.s32.totalorder %s68, %s71
      %p80 = scmp.eq.s32.totalorder %s37, 1
      %p81 = por %p79, %p80
      %p82 = scmp.ne.s32.totalorder %s71, %s72
      %p83 = scmp.eq.s32.totalorder %s37, 0
      %p84 = por %p82, %p83
      %p85 = scmp.ne.s32.totalorder %s71, %s72
      %p86 = scmp.eq.s32.totalorder %s38, 1
      %p87 = por %p85, %p86
      %p89 = scmp.ne.s32.totalorder %s72, %s88
      %p90 = scmp.eq.s32.totalorder %s38, 0
      %p91 = por %p89, %p90
      %s93 = sadd.s32 %s92, 1
      %p96 = scmp.eq.s32.totalorder %s32, 1
      %p97 = scmp.ne.s32.totalorder %s92, %s94
      %p98 = scmp.eq.s32.totalorder %s32, 0
      %p99 = por %p97, %p98
      %p100 = scmp.ne.s32.totalorder %s92, %s94
      %p101 = scmp.eq.s32.totalorder %s37, 1
      %p102 = por %p100, %p101
      %p103 = scmp.ne.s32.totalorder %s94, %s95
      %p104 = scmp.eq.s32.totalorder %s37, 0
      %p105 = por %p103, %p104
      %p106 = scmp.ne.s32.totalorder %s94, %s95
      %p107 = scmp.eq.s32.totalorder %s38, 1
      %p108 = por %p106, %p107
      %p110 = scmp.ne.s32.totalorder %s95, %s109
      %p111 = scmp.eq.s32.totalorder %s38, 0
      %p112 = por %p110, %p111
      %s114 = sadd.s32 %s113, 1
      %p117 = scmp.eq.s32.totalorder %s32, 1
      %p118 = scmp.ne.s32.totalorder %s113, %s115
      %p119 = scmp.eq.s32.totalorder %s32, 0
      %p120 = por %p118, %p119
      %p121 = scmp.ne.s32.totalorder %s113, %s115
      %p122 = scmp.eq.s32.totalorder %s37, 1
      %p123 = por %p121, %p122
      %p124 = scmp.ne.s32.totalorder %s115, %s116
      %p125 = scmp.eq.s32.totalorder %s37, 0
      %p126 = por %p124, %p125
      %p127 = scmp.ne.s32.totalorder %s115, %s116
      %p128 = scmp.eq.s32.totalorder %s38, 1
      %p129 = por %p127, %p128
      %p131 = scmp.ne.s32.totalorder %s116, %s130
      %p132 = scmp.eq.s32.totalorder %s38, 0
      %p133 = por %p131, %p132
      %s135 = sadd.s32 %s134, 1
      %p138 = scmp.eq.s32.totalorder %s32, 1
      %p139 = scmp.ne.s32.totalorder %s134, %s136
      %p140 = scmp.eq.s32.totalorder %s32, 0
      %p141 = por %p139, %p140
      %p142 = scmp.ne.s32.totalorder %s134, %s136
      %p143 = scmp.eq.s32.totalorder %s37, 1
      %p144 = por %p142, %p143
      %p145 = scmp.ne.s32.totalorder %s136, %s137
      %p146 = scmp.eq.s32.totalorder %s37, 0
      %p147 = por %p145, %p146
      %p148 = scmp.ne.s32.totalorder %s136, %s137
      %p149 = scmp.eq.s32.totalorder %s38, 1
      %p150 = por %p148, %p149
      %p152 = scmp.ne.s32.totalorder %s137, %s151
      %p153 = scmp.eq.s32.totalorder %s38, 0
      %p154 = por %p152, %p153
      %s156 = sadd.s32 %s155, 1
      %p159 = scmp.eq.s32.totalorder %s32, 1
      %p160 = scmp.ne.s32.totalorder %s155, %s157
      %p161 = scmp.eq.s32.totalorder %s32, 0
      %p162 = por %p160, %p161
      %p163 = scmp.ne.s32.totalorder %s155, %s157
      %p164 = scmp.eq.s32.totalorder %s37, 1
      %p165 = por %p163, %p164
      %p166 = scmp.ne.s32.totalorder %s157, %s158
      %p167 = scmp.eq.s32.totalorder %s37, 0
      %p168 = por %p166, %p167
      %p169 = scmp.ne.s32.totalorder %s157, %s158
      %p170 = scmp.eq.s32.totalorder %s38, 1
      %p171 = por %p169, %p170
      %p173 = scmp.ne.s32.totalorder %s158, %s172
      %p174 = scmp.eq.s32.totalorder %s38, 0
      %p175 = por %p173, %p174
      %s177 = sadd.s32 %s176, 1
      %p180 = scmp.eq.s32.totalorder %s32, 1
      %p181 = scmp.ne.s32.totalorder %s176, %s178
      %p182 = scmp.eq.s32.totalorder %s32, 0
      %p183 = por %p181, %p182
      %p184 = scmp.ne.s32.totalorder %s176, %s178
      %p185 = scmp.eq.s32.totalorder %s37, 1
      %p186 = por %p184, %p185
      %p187 = scmp.ne.s32.totalorder %s178, %s179
      %p188 = scmp.eq.s32.totalorder %s37, 0
      %p189 = por %p187, %p188
      %p190 = scmp.ne.s32.totalorder %s178, %s179
      %p191 = scmp.eq.s32.totalorder %s38, 1
      %p192 = por %p190, %p191
      %p194 = scmp.ne.s32.totalorder %s179, %s193
      %p195 = scmp.eq.s32.totalorder %s38, 0
      %p196 = por %p194, %p195
      %s198 = sadd.s32 %s197, 1
      %p201 = scmp.eq.s32.totalorder %s32, 1
      %p202 = scmp.ne.s32.totalorder %s197, %s199
      %p203 = scmp.eq.s32.totalorder %s32, 0
      %p204 = por %p202, %p203
      %p205 = scmp.ne.s32.totalorder %s197, %s199
      %p206 = scmp.eq.s32.totalorder %s37, 1
      %p207 = por %p205, %p206
      %p208 = scmp.ne.s32.totalorder %s199, %s200
      %p209 = scmp.eq.s32.totalorder %s37, 0
      %p210 = por %p208, %p209
      %p211 = scmp.ne.s32.totalorder %s199, %s200
      %p212 = scmp.eq.s32.totalorder %s38, 1
      %p213 = por %p211, %p212
      %p215 = scmp.ne.s32.totalorder %s200, %s214
      %p216 = scmp.eq.s32.totalorder %s38, 0
      %p217 = por %p215, %p216
      %s219 = sadd.s32 %s218, 1
      %p222 = scmp.eq.s32.totalorder %s32, 1
      %p223 = scmp.ne.s32.totalorder %s218, %s220
      %p224 = scmp.eq.s32.totalorder %s32, 0
      %p225 = por %p223, %p224
      %p226 = scmp.ne.s32.totalorder %s218, %s220
      %p227 = scmp.eq.s32.totalorder %s37, 1
      %p228 = por %p226, %p227
      %p229 = scmp.ne.s32.totalorder %s220, %s221
      %p230 = scmp.eq.s32.totalorder %s37, 0
      %p231 = por %p229, %p230
      %p232 = scmp.ne.s32.totalorder %s220, %s221
      %p233 = scmp.eq.s32.totalorder %s38, 1
      %p234 = por %p232, %p233
      %p236 = scmp.ne.s32.totalorder %s221, %s235
      %p237 = scmp.eq.s32.totalorder %s38, 0
      %p238 = por %p236, %p237
      %s240 = sadd.s32 %s239, 1
      %p243 = scmp.eq.s32.totalorder %s32, 1
      %p244 = scmp.ne.s32.totalorder %s239, %s241
      %p245 = scmp.eq.s32.totalorder %s32, 0
      %p246 = por %p244, %p245
      %p247 = scmp.ne.s32.totalorder %s239, %s241
      %p248 = scmp.eq.s32.totalorder %s37, 1
      %p249 = por %p247, %p248
      %p250 = scmp.ne.s32.totalorder %s241, %s242
      %p251 = scmp.eq.s32.totalorder %s37, 0
      %p252 = por %p250, %p251
      %p253 = scmp.ne.s32.totalorder %s241, %s242
      %p254 = scmp.eq.s32.totalorder %s38, 1
      %p255 = por %p253, %p254
      %p257 = scmp.ne.s32.totalorder %s242, %s256
      %p258 = scmp.eq.s32.totalorder %s38, 0
      %p259 = por %p257, %p258
      %s260 = ssub.s32 %s32, %s39
      %p261 = scmp.eq.s32.totalorder %s260, 0
      %s263 = sadd.s32 %s262, 1
      %s264 = scalar_select %p261, %s262, %s263
      %p267 = pneg %p261
      %p268 = scmp.eq.s32.totalorder %s32, 1
      %p269 = por %p267, %p268
      %p270 = scmp.ne.s32.totalorder %s262, %s265
      %p271 = scmp.eq.s32.totalorder %s32, 0
      %p272 = por %p270, %p271
      %p273 = scmp.ne.s32.totalorder %s262, %s265
      %p274 = scmp.eq.s32.totalorder %s37, 1
      %p275 = por %p273, %p274
      %p276 = scmp.ne.s32.totalorder %s265, %s266
      %p277 = scmp.eq.s32.totalorder %s37, 0
      %p278 = por %p276, %p277
      %p279 = scmp.ne.s32.totalorder %s265, %s266
      %p280 = scmp.eq.s32.totalorder %s38, 1
      %p281 = por %p279, %p280
      %p283 = scmp.ne.s32.totalorder %s266, %s282
      %p284 = scmp.eq.s32.totalorder %s38, 0
      %p285 = por %p283, %p284
      %s286 = ssub.s32 %s32, %s39
      %p287 = scmp.eq.s32.totalorder %s286, 0
      %s289 = sadd.s32 %s288, 1
      %s290 = scalar_select %p287, %s288, %s289
      %p293 = pneg %p287
      %p294 = scmp.eq.s32.totalorder %s32, 1
      %p295 = por %p293, %p294
      %p296 = scmp.ne.s32.totalorder %s288, %s291
      %p297 = scmp.eq.s32.totalorder %s32, 0
      %p298 = por %p296, %p297
      %p299 = scmp.ne.s32.totalorder %s288, %s291
      %p300 = scmp.eq.s32.totalorder %s37, 1
      %p301 = por %p299, %p300
      %p302 = scmp.ne.s32.totalorder %s291, %s292
      %p303 = scmp.eq.s32.totalorder %s37, 0
      %p304 = por %p302, %p303
      %p305 = scmp.ne.s32.totalorder %s291, %s292
      %p306 = scmp.eq.s32.totalorder %s38, 1
      %p307 = por %p305, %p306
      %p309 = scmp.ne.s32.totalorder %s292, %s308
      %p310 = scmp.eq.s32.totalorder %s38, 0
      %p311 = por %p309, %p310
      %p312 = scmp.le.s32.totalorder 1, %s32
      %p313 = scmp.lt.s32.totalorder %s32, 3
      %p314 = pnand %p312, %p313
      %p315 = pneg %p314
      // Predicated region
      $region9: #{tpu_custom_call.1} parent=5 // pred_check
        _
      $region10: #{tpu_custom_call.1} parent=5 // pred_check_branch
        %317 = sbr.rel (%p314) target = $region12
      $region11: #{tpu_custom_call.1} parent=5 // pred_region
        %s318 = ssub.s32 %s32, 1
        // Predicated region
        $region13: #{tpu_custom_call.1} parent=11 // pred_check
          %p319 = pneg %p105
        $region14: #{tpu_custom_call.1} parent=11 // pred_check_branch
          %321 = sbr.rel (%p319) target = $region16
        $region15: #{tpu_custom_call.1} parent=11 // pred_region
          %s323 = ssub.s32 1024, 1024
          %324 = vsyncadd [#allocation6], %s323
          %s325 = sshll.u32 [#allocation7], 4
          %s326 = int_to_ptr.vmem [resolvable:$true] %s325
          %331 = dma.hbm_to_vmem [thread:$0]  %s2, 1024, %s326, [#allocation6], 64, 64, 4
        $region16: #{tpu_custom_call.1} parent=11 // pred_fallthru
          _
        // Predicated region
        $region17: #{tpu_custom_call.1} parent=11 // pred_check
          %p332 = pneg %p126
        $region18: #{tpu_custom_call.1} parent=11 // pred_check_branch
          %334 = sbr.rel (%p332) target = $region20
        $region19: #{tpu_custom_call.1} parent=11 // pred_region
          _
        $region20: #{tpu_custom_call.1} parent=11 // pred_fallthru
          _
        // Predicated region
        $region21: #{tpu_custom_call.1} parent=11 // pred_check
          %p335 = pneg %p147
        $region22: #{tpu_custom_call.1} parent=11 // pred_check_branch
          %337 = sbr.rel (%p335) target = $region24
        $region23: #{tpu_custom_call.1} parent=11 // pred_region
          %s339 = ssub.s32 1024, 1024
          %340 = vsyncadd [#allocation9], %s339
          %s341 = sshll.u32 [#allocation8], 4
          %s342 = int_to_ptr.vmem [resolvable:$true] %s341
          %347 = dma.hbm_to_vmem [thread:$0]  %s4, 1024, %s342, [#allocation9], 64, 64, 4
        $region24: #{tpu_custom_call.1} parent=11 // pred_fallthru
          _
        // Predicated region
        $region25: #{tpu_custom_call.1} parent=11 // pred_check
          %p348 = pneg %p168
        $region26: #{tpu_custom_call.1} parent=11 // pred_check_branch
          %350 = sbr.rel (%p348) target = $region28
        $region27: #{tpu_custom_call.1} parent=11 // pred_region
          _
        $region28: #{tpu_custom_call.1} parent=11 // pred_fallthru
          _
        // Predicated region
        $region29: #{tpu_custom_call.1} parent=11 // pred_check
          %p351 = pneg %p189
        $region30: #{tpu_custom_call.1} parent=11 // pred_check_branch
          %353 = sbr.rel (%p351) target = $region32
        $region31: #{tpu_custom_call.1} parent=11 // pred_region
          %s355 = ssub.s32 1024, 1024
          %356 = vsyncadd [#allocation9], %s355
          %s357 = sshll.u32 [#allocation10], 4
          %s358 = int_to_ptr.vmem [resolvable:$true] %s357
          %363 = dma.hbm_to_vmem [thread:$0]  %s6, 1024, %s358, [#allocation9], 64, 64, 4
        $region32: #{tpu_custom_call.1} parent=11 // pred_fallthru
          _
        // Predicated region
        $region33: #{tpu_custom_call.1} parent=11 // pred_check
          %p364 = pneg %p210
        $region34: #{tpu_custom_call.1} parent=11 // pred_check_branch
          %366 = sbr.rel (%p364) target = $region36
        $region35: #{tpu_custom_call.1} parent=11 // pred_region
          _
        $region36: #{tpu_custom_call.1} parent=11 // pred_fallthru
          _
        // Predicated region
        $region37: #{tpu_custom_call.1} parent=11 // pred_check
          %p367 = pneg %p231
        $region38: #{tpu_custom_call.1} parent=11 // pred_check_branch
          %369 = sbr.rel (%p367) target = $region40
        $region39: #{tpu_custom_call.1} parent=11 // pred_region
          %s371 = ssub.s32 1024, 1024
          %372 = vsyncadd [#allocation12], %s371
          %s373 = sshll.u32 [#allocation11], 4
          %s374 = int_to_ptr.vmem [resolvable:$true] %s373
          %379 = dma.hbm_to_vmem [thread:$0]  %s8, 1024, %s374, [#allocation12], 64, 64, 4
        $region40: #{tpu_custom_call.1} parent=11 // pred_fallthru
          _
        // Predicated region
        $region41: #{tpu_custom_call.1} parent=11 // pred_check
          %p380 = pneg %p252
        $region42: #{tpu_custom_call.1} parent=11 // pred_check_branch
          %382 = sbr.rel (%p380) target = $region44
        $region43: #{tpu_custom_call.1} parent=11 // pred_region
          _
        $region44: #{tpu_custom_call.1} parent=11 // pred_fallthru
          _
      $region12: #{tpu_custom_call.1} parent=5 // pred_fallthru
        _
      %p383 = scmp.lt.s32.totalorder %s32, 2
      // Predicated region
      $region45: #{tpu_custom_call.1} parent=5 // pred_check
        %p384 = pneg %p383
      $region46: #{tpu_custom_call.1} parent=5 // pred_check_branch
        %386 = sbr.rel (%p384) target = $region48
      $region47: #{tpu_custom_call.1} parent=5 // pred_region
        // Predicated region
        $region49: #{tpu_custom_call.1} parent=47 // pred_check
          %p387 = pneg %p52
        $region50: #{tpu_custom_call.1} parent=47 // pred_check_branch
          %389 = sbr.rel (%p387) target = $region52
        $region51: #{tpu_custom_call.1} parent=47 // pred_region
          %s390 = sand.u32 %s42, 1
          %s391 = scalar_lea.sflag [#allocation3], %s390
          %s392 = sand.u32 %s42, 1
          %s393 = smul.addr %s392, 8
          %s394 = scalar_lea.vmem [#allocation2], %s393
          %s396 = ssub.s32 128, 128
          %397 = vsyncadd %s391, %s396
          %s398 = smul.addr %s32, 128
          %s399 = scalar_lea.hbm %s0, %s398
          %s401 = sshll.u32 %s394, 4
          %s402 = int_to_ptr.vmem [resolvable:$true] %s401
          %404 = dma.hbm_to_vmem [thread:$0]  %s399, 128, %s402, %s391
        $region52: #{tpu_custom_call.1} parent=47 // pred_fallthru
          _
        // Predicated region
        $region53: #{tpu_custom_call.1} parent=47 // pred_check
          %p405 = pneg %p78
        $region54: #{tpu_custom_call.1} parent=47 // pred_check_branch
          %407 = sbr.rel (%p405) target = $region56
        $region55: #{tpu_custom_call.1} parent=47 // pred_region
          %s408 = sand.u32 %s32, 1
          %s409 = scalar_lea.sflag [#allocation6], %s408
          %s410 = sand.u32 %s68, 1
          %s411 = smul.addr %s410, 4
          %s412 = scalar_lea.vmem [#allocation5], %s411
          %s414 = ssub.s32 64, 64
          %415 = vsyncadd %s409, %s414
          %s416 = smul.addr %s32, 64
          %s417 = scalar_lea.hbm %s1, %s416
          %s419 = sshll.u32 %s412, 4
          %s420 = int_to_ptr.vmem [resolvable:$true] %s419
          %422 = dma.hbm_to_vmem [thread:$0]  %s417, 64, %s420, %s409
        $region56: #{tpu_custom_call.1} parent=47 // pred_fallthru
          _
      $region48: #{tpu_custom_call.1} parent=5 // pred_fallthru
        _
      %p423 = scmp.le.s32.totalorder 1, %s32
      %p424 = scmp.lt.s32.totalorder %s32, 3
      %p425 = pnand %p423, %p424
      %p426 = pneg %p425
      // Predicated region
      $region57: #{tpu_custom_call.1} parent=5 // pred_check
        _
      $region58: #{tpu_custom_call.1} parent=5 // pred_check_branch
        %428 = sbr.rel (%p425) target = $region60
      $region59: #{tpu_custom_call.1} parent=5 // pred_region
        %s429 = ssub.s32 %s32, 1
        %s430 = sand.u32 %s45, 1
        %s431 = scalar_lea.sflag [#allocation3], %s430
        %s432 = sand.u32 %s45, 1
        %s433 = smul.addr %s432, 8
        %s434 = scalar_lea.vmem [#allocation2], %s433
        // Predicated region
        $region61: #{tpu_custom_call.1} parent=59 // pred_check
          %p435 = pneg %p58
        $region62: #{tpu_custom_call.1} parent=59 // pred_check_branch
          %437 = sbr.rel (%p435) target = $region64
        $region63: #{tpu_custom_call.1} parent=59 // pred_region
          %438 = dma.done %s431, 128
        $region64: #{tpu_custom_call.1} parent=59 // pred_fallthru
          _
        %s439 = sand.u32 %s37, 1
        %s440 = scalar_lea.sflag [#allocation6], %s439
        %s441 = sand.u32 %s71, 1
        %s442 = smul.addr %s441, 4
        %s443 = scalar_lea.vmem [#allocation5], %s442
        // Predicated region
        $region65: #{tpu_custom_call.1} parent=59 // pred_check
          %p444 = pneg %p84
        $region66: #{tpu_custom_call.1} parent=59 // pred_check_branch
          %446 = sbr.rel (%p444) target = $region68
        $region67: #{tpu_custom_call.1} parent=59 // pred_region
          %447 = dma.done %s440, 64
        $region68: #{tpu_custom_call.1} parent=59 // pred_fallthru
          _
        // Predicated region
        $region69: #{tpu_custom_call.1} parent=59 // pred_check
          %p448 = pneg %p105
        $region70: #{tpu_custom_call.1} parent=59 // pred_check_branch
          %450 = sbr.rel (%p448) target = $region72
        $region71: #{tpu_custom_call.1} parent=59 // pred_region
          %451 = dma.done [#allocation6], 1024
        $region72: #{tpu_custom_call.1} parent=59 // pred_fallthru
          _
        // Predicated region
        $region73: #{tpu_custom_call.1} parent=59 // pred_check
          %p452 = pneg %p147
        $region74: #{tpu_custom_call.1} parent=59 // pred_check_branch
          %454 = sbr.rel (%p452) target = $region76
        $region75: #{tpu_custom_call.1} parent=59 // pred_region
          %455 = dma.done [#allocation9], 1024
        $region76: #{tpu_custom_call.1} parent=59 // pred_fallthru
          _
        // Predicated region
        $region77: #{tpu_custom_call.1} parent=59 // pred_check
          %p456 = pneg %p189
        $region78: #{tpu_custom_call.1} parent=59 // pred_check_branch
          %458 = sbr.rel (%p456) target = $region80
        $region79: #{tpu_custom_call.1} parent=59 // pred_region
          %459 = dma.done [#allocation9], 1024
        $region80: #{tpu_custom_call.1} parent=59 // pred_fallthru
          _
        // Predicated region
        $region81: #{tpu_custom_call.1} parent=59 // pred_check
          %p460 = pneg %p231
        $region82: #{tpu_custom_call.1} parent=59 // pred_check_branch
          %462 = sbr.rel (%p460) target = $region84
        $region83: #{tpu_custom_call.1} parent=59 // pred_region
          %463 = dma.done [#allocation12], 1024
        $region84: #{tpu_custom_call.1} parent=59 // pred_fallthru
          _
        %s464 = sand.u32 %s45, 1
        %s465 = scalar_lea.sflag [#allocation3], %s464
        %s466 = sand.u32 %s45, 1
        %s467 = smul.addr %s466, 8
        %s468 = scalar_lea.vmem [#allocation2], %s467
        %p469 = pneg %p58
        %p470 = pneg %p55
        %s471 = sand.u32 %s37, 1
        %s472 = scalar_lea.sflag [#allocation6], %s471
        %s473 = sand.u32 %s71, 1
        %s474 = smul.addr %s473, 4
        %s475 = scalar_lea.vmem [#allocation5], %s474
        %p476 = pneg %p84
        %p477 = pneg %p81
        %p478 = pneg %p105
        %p479 = pneg %p102
        %p480 = pneg %p126
        %p481 = pneg %p123
        %p482 = pneg %p147
        %p483 = pneg %p144
        %p484 = pneg %p168
        %p485 = pneg %p165
        %p486 = pneg %p189
        %p487 = pneg %p186
        %p488 = pneg %p210
        %p489 = pneg %p207
        %p490 = pneg %p231
        %p491 = pneg %p228
        %p492 = pneg %p252
        %p493 = pneg %p249
        %p494 = pneg %p278
        %p495 = pneg %p275
        %s496 = sand.u32 %s265, 1
        %s497 = scalar_lea.sflag [#allocation4], %s496
        %s498 = sand.u32 %s265, 1
        %s499 = smul.addr %s498, 4
        %s500 = scalar_lea.vmem [#allocation13], %s499
        %p501 = pneg %p304
        %p502 = pneg %p301
        %s503 = sand.u32 %s291, 1
        %s504 = scalar_lea.sflag [#allocation15], %s503
        %s505 = sand.u32 %s291, 1
        %s506 = smul.addr %s505, 8
        %s507 = scalar_lea.vmem [#allocation14], %s506
        %v509 = vld [vmem:[%s434] sm:$0xff]
        %v510 = vld [vmem:[%s443] sm:$0xf]
        %v511 = vunpack.c.l.bf16 %v510
        %v512 = vmul.f32 %v511, 1.1111112
        %v513 = vmul.f32 %v509, %v512
        %v514 = vpack.c.bf16 %v513, %v513
        %v515 = vld [vmem:[#allocation7] sm:$0xf]
        %v516 = vld [vmem:[#allocation7 + $0x4] sm:$0xf]
        %v517 = vld [vmem:[#allocation7 + $0x8] sm:$0xf]
        %v518 = vld [vmem:[#allocation7 + $0xc] sm:$0xf]
        %v519 = vld [vmem:[#allocation7 + $0x10] sm:$0xf]
        %v520 = vld [vmem:[#allocation7 + $0x14] sm:$0xf]
        %v521 = vld [vmem:[#allocation7 + $0x18] sm:$0xf]
        %v522 = vld [vmem:[#allocation7 + $0x1c] sm:$0xf]
        %v523 = vld [vmem:[#allocation7 + $0x20] sm:$0xf]
        %v524 = vld [vmem:[#allocation7 + $0x24] sm:$0xf]
        %v525 = vld [vmem:[#allocation7 + $0x28] sm:$0xf]
        %v526 = vld [vmem:[#allocation7 + $0x2c] sm:$0xf]
        %v527 = vld [vmem:[#allocation7 + $0x30] sm:$0xf]
        %v528 = vld [vmem:[#allocation7 + $0x34] sm:$0xf]
        %v529 = vld [vmem:[#allocation7 + $0x38] sm:$0xf]
        %v530 = vld [vmem:[#allocation7 + $0x3c] sm:$0xf]
        %v531 = vld [vmem:[%s3] sm:$0x1]
        %v533 = vlaneseq
        %v534 = vshrl.u32 %v533, 7
        %v535 = vsub.s32 0, %v534
        %v536 = vrot.slane %v531, %v535
        %v554 = vunpack.c.l.b16 %v515
        %v555 = vunpack.c.l.b16 %v516
        %v556 = vunpack.c.l.b16 %v517
        %v557 = vunpack.c.l.b16 %v518
        %v558 = vunpack.c.l.b16 %v519
        %v559 = vunpack.c.l.b16 %v520
        %v560 = vunpack.c.l.b16 %v521
        %v561 = vunpack.c.l.b16 %v522
        %v562 = vunpack.c.l.b16 %v523
        %v563 = vunpack.c.l.b16 %v524
        %v564 = vunpack.c.l.b16 %v525
        %v565 = vunpack.c.l.b16 %v526
        %v566 = vunpack.c.l.b16 %v527
        %v567 = vunpack.c.l.b16 %v528
        %v568 = vunpack.c.l.b16 %v529
        %v569 = vunpack.c.l.b16 %v530
        %v570 = vpack.c.b16 %v555, %v554
        %v571 = vpack.c.b16 %v557, %v556
        %v572 = vpack.c.b16 %v559, %v558
        %v573 = vpack.c.b16 %v561, %v560
        %v574 = vpack.c.b16 %v563, %v562
        %v575 = vpack.c.b16 %v565, %v564
        %v576 = vpack.c.b16 %v567, %v566
        %v577 = vpack.c.b16 %v569, %v568
        %586 = vmatprep.subr.bf16.mxu0 0
        %587 = vmatpush1.bf16.msra.mxu0 %v570
        %588 = vmatprep.subr.bf16.mxu0 0
        %589 = vmatpush1.bf16.msra.mxu0 %v571
        %590 = vmatprep.subr.bf16.mxu0 0
        %591 = vmatpush1.bf16.msra.mxu0 %v572
        %592 = vmatprep.subr.bf16.mxu0 0
        %593 = vmatpush1.bf16.msra.mxu0 %v573
        %594 = vmatprep.subr.bf16.mxu0 0
        %595 = vmatpush1.bf16.msra.mxu0 %v574
        %596 = vmatprep.subr.bf16.mxu0 0
        %597 = vmatpush1.bf16.msra.mxu0 %v575
        %598 = vmatprep.subr.bf16.mxu0 0
        %599 = vmatpush1.bf16.msra.mxu0 %v576
        %600 = vmatprep.subr.bf16.mxu0 0
        %601 = vmatpush1.bf16.msra.mxu0 %v577
        %602 = vmatprep.subr.bf16.mxu0 0
        %603 = vmatpush1.bf16.msra.mxu0 0
        %604 = vmatprep.subr.bf16.mxu0 0
        %605 = vmatpush1.bf16.msra.mxu0 0
        %606 = vmatprep.subr.bf16.mxu0 0
        %607 = vmatpush1.bf16.msra.mxu0 0
        %608 = vmatprep.subr.bf16.mxu0 0
        %609 = vmatpush1.bf16.msra.mxu0 0
        %610 = vmatprep.subr.bf16.mxu0 0
        %611 = vmatpush1.bf16.msra.mxu0 0
        %612 = vmatprep.subr.bf16.mxu0 0
        %613 = vmatpush1.bf16.msra.mxu0 0
        %614 = vmatprep.subr.bf16.mxu0 0
        %615 = vmatpush1.bf16.msra.mxu0 0
        %616 = vmatprep.subr.bf16.mxu0 0
        %617 = vmatpush1.bf16.msra.mxu0 0
        %618 = vmatprep.mubr.bf16.mxu0 0
        %619 = vmatmul.mubr.bf16.gmra.mrb[0].mxu0 %v514
        %v620 = vpop.f32.mrb[0].mxu0
        %v621 = vadd.f32 %v536, %v620
        %v622 = vpop.f32.mrb[0].mxu0
        %v623 = vpop.f32.mrb[0].mxu0
        %v624 = vpop.f32.mrb[0].mxu0
        %625 = vdwg.mxu0
        %v626 = vmax.f32 %v621, 0.0
        %v627 = vpack.c.bf16 %v626, %v626
        %v628 = vld [vmem:[#allocation8] sm:$0xf]
        %v629 = vld [vmem:[#allocation8 + $0x4] sm:$0xf]
        %v630 = vld [vmem:[#allocation8 + $0x8] sm:$0xf]
        %v631 = vld [vmem:[#allocation8 + $0xc] sm:$0xf]
        %v632 = vld [vmem:[#allocation8 + $0x10] sm:$0xf]
        %v633 = vld [vmem:[#allocation8 + $0x14] sm:$0xf]
        %v634 = vld [vmem:[#allocation8 + $0x18] sm:$0xf]
        %v635 = vld [vmem:[#allocation8 + $0x1c] sm:$0xf]
        %v636 = vld [vmem:[#allocation8 + $0x20] sm:$0xf]
        %v637 = vld [vmem:[#allocation8 + $0x24] sm:$0xf]
        %v638 = vld [vmem:[#allocation8 + $0x28] sm:$0xf]
        %v639 = vld [vmem:[#allocation8 + $0x2c] sm:$0xf]
        %v640 = vld [vmem:[#allocation8 + $0x30] sm:$0xf]
        %v641 = vld [vmem:[#allocation8 + $0x34] sm:$0xf]
        %v642 = vld [vmem:[#allocation8 + $0x38] sm:$0xf]
        %v643 = vld [vmem:[#allocation8 + $0x3c] sm:$0xf]
        %v644 = vld [vmem:[%s5] sm:$0x1]
        %v646 = vlaneseq
        %v647 = vshrl.u32 %v646, 7
        %v648 = vsub.s32 0, %v647
        %v649 = vrot.slane %v644, %v648
        %v667 = vunpack.c.l.b16 %v628
        %v668 = vunpack.c.l.b16 %v629
        %v669 = vunpack.c.l.b16 %v630
        %v670 = vunpack.c.l.b16 %v631
        %v671 = vunpack.c.l.b16 %v632
        %v672 = vunpack.c.l.b16 %v633
        %v673 = vunpack.c.l.b16 %v634
        %v674 = vunpack.c.l.b16 %v635
        %v675 = vunpack.c.l.b16 %v636
        %v676 = vunpack.c.l.b16 %v637
        %v677 = vunpack.c.l.b16 %v638
        %v678 = vunpack.c.l.b16 %v639
        %v679 = vunpack.c.l.b16 %v640
        %v680 = vunpack.c.l.b16 %v641
        %v681 = vunpack.c.l.b16 %v642
        %v682 = vunpack.c.l.b16 %v643
        %v683 = vpack.c.b16 %v668, %v667
        %v684 = vpack.c.b16 %v670, %v669
        %v685 = vpack.c.b16 %v672, %v671
        %v686 = vpack.c.b16 %v674, %v673
        %v687 = vpack.c.b16 %v676, %v675
        %v688 = vpack.c.b16 %v678, %v677
        %v689 = vpack.c.b16 %v680, %v679
        %v690 = vpack.c.b16 %v682, %v681
        %699 = vmatprep.subr.bf16.mxu0 0
        %700 = vmatpush1.bf16.msra.mxu0 %v683
        %701 = vmatprep.subr.bf16.mxu0 0
        %702 = vmatpush1.bf16.msra.mxu0 %v684
        %703 = vmatprep.subr.bf16.mxu0 0
        %704 = vmatpush1.bf16.msra.mxu0 %v685
        %705 = vmatprep.subr.bf16.mxu0 0
        %706 = vmatpush1.bf16.msra.mxu0 %v686
        %707 = vmatprep.subr.bf16.mxu0 0
        %708 = vmatpush1.bf16.msra.mxu0 %v687
        %709 = vmatprep.subr.bf16.mxu0 0
        %710 = vmatpush1.bf16.msra.mxu0 %v688
        %711 = vmatprep.subr.bf16.mxu0 0
        %712 = vmatpush1.bf16.msra.mxu0 %v689
        %713 = vmatprep.subr.bf16.mxu0 0
        %714 = vmatpush1.bf16.msra.mxu0 %v690
        %715 = vmatprep.subr.bf16.mxu0 0
        %716 = vmatpush1.bf16.msra.mxu0 0
        %717 = vmatprep.subr.bf16.mxu0 0
        %718 = vmatpush1.bf16.msra.mxu0 0
        %719 = vmatprep.subr.bf16.mxu0 0
        %720 = vmatpush1.bf16.msra.mxu0 0
        %721 = vmatprep.subr.bf16.mxu0 0
        %722 = vmatpush1.bf16.msra.mxu0 0
        %723 = vmatprep.subr.bf16.mxu0 0
        %724 = vmatpush1.bf16.msra.mxu0 0
        %725 = vmatprep.subr.bf16.mxu0 0
        %726 = vmatpush1.bf16.msra.mxu0 0
        %727 = vmatprep.subr.bf16.mxu0 0
        %728 = vmatpush1.bf16.msra.mxu0 0
        %729 = vmatprep.subr.bf16.mxu0 0
        %730 = vmatpush1.bf16.msra.mxu0 0
        %731 = vmatprep.mubr.bf16.mxu0 0
        %732 = vmatmul.mubr.bf16.gmra.mrb[0].mxu0 %v627
        %v733 = vpop.f32.mrb[0].mxu0
        %v734 = vadd.f32 %v649, %v733
        %v735 = vpop.f32.mrb[0].mxu0
        %v736 = vpop.f32.mrb[0].mxu0
        %v737 = vpop.f32.mrb[0].mxu0
        %738 = vdwg.mxu0
        %v739 = vmax.f32 %v734, 0.0
        %v740 = vpack.c.bf16 %v739, %v739
        %v741 = vld [vmem:[#allocation10] sm:$0xf]
        %v742 = vld [vmem:[#allocation10 + $0x4] sm:$0xf]
        %v743 = vld [vmem:[#allocation10 + $0x8] sm:$0xf]
        %v744 = vld [vmem:[#allocation10 + $0xc] sm:$0xf]
        %v745 = vld [vmem:[#allocation10 + $0x10] sm:$0xf]
        %v746 = vld [vmem:[#allocation10 + $0x14] sm:$0xf]
        %v747 = vld [vmem:[#allocation10 + $0x18] sm:$0xf]
        %v748 = vld [vmem:[#allocation10 + $0x1c] sm:$0xf]
        %v749 = vld [vmem:[#allocation10 + $0x20] sm:$0xf]
        %v750 = vld [vmem:[#allocation10 + $0x24] sm:$0xf]
        %v751 = vld [vmem:[#allocation10 + $0x28] sm:$0xf]
        %v752 = vld [vmem:[#allocation10 + $0x2c] sm:$0xf]
        %v753 = vld [vmem:[#allocation10 + $0x30] sm:$0xf]
        %v754 = vld [vmem:[#allocation10 + $0x34] sm:$0xf]
        %v755 = vld [vmem:[#allocation10 + $0x38] sm:$0xf]
        %v756 = vld [vmem:[#allocation10 + $0x3c] sm:$0xf]
        %v757 = vld [vmem:[%s7] sm:$0x1]
        %v759 = vlaneseq
        %v760 = vshrl.u32 %v759, 7
        %v761 = vsub.s32 0, %v760
        %v762 = vrot.slane %v757, %v761
        %v780 = vunpack.c.l.b16 %v741
        %v781 = vunpack.c.l.b16 %v742
        %v782 = vunpack.c.l.b16 %v743
        %v783 = vunpack.c.l.b16 %v744
        %v784 = vunpack.c.l.b16 %v745
        %v785 = vunpack.c.l.b16 %v746
        %v786 = vunpack.c.l.b16 %v747
        %v787 = vunpack.c.l.b16 %v748
        %v788 = vunpack.c.l.b16 %v749
        %v789 = vunpack.c.l.b16 %v750
        %v790 = vunpack.c.l.b16 %v751
        %v791 = vunpack.c.l.b16 %v752
        %v792 = vunpack.c.l.b16 %v753
        %v793 = vunpack.c.l.b16 %v754
        %v794 = vunpack.c.l.b16 %v755
        %v795 = vunpack.c.l.b16 %v756
        %v796 = vpack.c.b16 %v781, %v780
        %v797 = vpack.c.b16 %v783, %v782
        %v798 = vpack.c.b16 %v785, %v784
        %v799 = vpack.c.b16 %v787, %v786
        %v800 = vpack.c.b16 %v789, %v788
        %v801 = vpack.c.b16 %v791, %v790
        %v802 = vpack.c.b16 %v793, %v792
        %v803 = vpack.c.b16 %v795, %v794
        %812 = vmatprep.subr.bf16.mxu0 0
        %813 = vmatpush1.bf16.msra.mxu0 %v796
        %814 = vmatprep.subr.bf16.mxu0 0
        %815 = vmatpush1.bf16.msra.mxu0 %v797
        %816 = vmatprep.subr.bf16.mxu0 0
        %817 = vmatpush1.bf16.msra.mxu0 %v798
        %818 = vmatprep.subr.bf16.mxu0 0
        %819 = vmatpush1.bf16.msra.mxu0 %v799
        %820 = vmatprep.subr.bf16.mxu0 0
        %821 = vmatpush1.bf16.msra.mxu0 %v800
        %822 = vmatprep.subr.bf16.mxu0 0
        %823 = vmatpush1.bf16.msra.mxu0 %v801
        %824 = vmatprep.subr.bf16.mxu0 0
        %825 = vmatpush1.bf16.msra.mxu0 %v802
        %826 = vmatprep.subr.bf16.mxu0 0
        %827 = vmatpush1.bf16.msra.mxu0 %v803
        %828 = vmatprep.subr.bf16.mxu0 0
        %829 = vmatpush1.bf16.msra.mxu0 0
        %830 = vmatprep.subr.bf16.mxu0 0
        %831 = vmatpush1.bf16.msra.mxu0 0
        %832 = vmatprep.subr.bf16.mxu0 0
        %833 = vmatpush1.bf16.msra.mxu0 0
        %834 = vmatprep.subr.bf16.mxu0 0
        %835 = vmatpush1.bf16.msra.mxu0 0
        %836 = vmatprep.subr.bf16.mxu0 0
        %837 = vmatpush1.bf16.msra.mxu0 0
        %838 = vmatprep.subr.bf16.mxu0 0
        %839 = vmatpush1.bf16.msra.mxu0 0
        %840 = vmatprep.subr.bf16.mxu0 0
        %841 = vmatpush1.bf16.msra.mxu0 0
        %842 = vmatprep.subr.bf16.mxu0 0
        %843 = vmatpush1.bf16.msra.mxu0 0
        %844 = vmatprep.mubr.bf16.mxu0 0
        %845 = vmatmul.mubr.bf16.gmra.mrb[0].mxu0 %v740
        %v846 = vpop.f32.mrb[0].mxu0
        %v847 = vadd.f32 %v762, %v846
        %v848 = vpop.f32.mrb[0].mxu0
        %v849 = vpop.f32.mrb[0].mxu0
        %v850 = vpop.f32.mrb[0].mxu0
        %851 = vdwg.mxu0
        %v852 = vmax.f32 %v847, 0.0
        %v853 = vpack.c.bf16 %v852, %v852
        %v854 = vld [vmem:[#allocation11] sm:$0xf]
        %v855 = vld [vmem:[#allocation11 + $0x4] sm:$0xf]
        %v856 = vld [vmem:[#allocation11 + $0x8] sm:$0xf]
        %v857 = vld [vmem:[#allocation11 + $0xc] sm:$0xf]
        %v858 = vld [vmem:[#allocation11 + $0x10] sm:$0xf]
        %v859 = vld [vmem:[#allocation11 + $0x14] sm:$0xf]
        %v860 = vld [vmem:[#allocation11 + $0x18] sm:$0xf]
        %v861 = vld [vmem:[#allocation11 + $0x1c] sm:$0xf]
        %v862 = vld [vmem:[#allocation11 + $0x20] sm:$0xf]
        %v863 = vld [vmem:[#allocation11 + $0x24] sm:$0xf]
        %v864 = vld [vmem:[#allocation11 + $0x28] sm:$0xf]
        %v865 = vld [vmem:[#allocation11 + $0x2c] sm:$0xf]
        %v866 = vld [vmem:[#allocation11 + $0x30] sm:$0xf]
        %v867 = vld [vmem:[#allocation11 + $0x34] sm:$0xf]
        %v868 = vld [vmem:[#allocation11 + $0x38] sm:$0xf]
        %v869 = vld [vmem:[#allocation11 + $0x3c] sm:$0xf]
        %v870 = vld [vmem:[%s9] sm:$0x1]
        %v872 = vlaneseq
        %v873 = vshrl.u32 %v872, 7
        %v874 = vsub.s32 0, %v873
        %v875 = vrot.slane %v870, %v874
        %v893 = vunpack.c.l.b16 %v854
        %v894 = vunpack.c.l.b16 %v855
        %v895 = vunpack.c.l.b16 %v856
        %v896 = vunpack.c.l.b16 %v857
        %v897 = vunpack.c.l.b16 %v858
        %v898 = vunpack.c.l.b16 %v859
        %v899 = vunpack.c.l.b16 %v860
        %v900 = vunpack.c.l.b16 %v861
        %v901 = vunpack.c.l.b16 %v862
        %v902 = vunpack.c.l.b16 %v863
        %v903 = vunpack.c.l.b16 %v864
        %v904 = vunpack.c.l.b16 %v865
        %v905 = vunpack.c.l.b16 %v866
        %v906 = vunpack.c.l.b16 %v867
        %v907 = vunpack.c.l.b16 %v868
        %v908 = vunpack.c.l.b16 %v869
        %v909 = vpack.c.b16 %v894, %v893
        %v910 = vpack.c.b16 %v896, %v895
        %v911 = vpack.c.b16 %v898, %v897
        %v912 = vpack.c.b16 %v900, %v899
        %v913 = vpack.c.b16 %v902, %v901
        %v914 = vpack.c.b16 %v904, %v903
        %v915 = vpack.c.b16 %v906, %v905
        %v916 = vpack.c.b16 %v908, %v907
        %925 = vmatprep.subr.bf16.mxu0 0
        %926 = vmatpush1.bf16.msra.mxu0 %v909
        %927 = vmatprep.subr.bf16.mxu0 0
        %928 = vmatpush1.bf16.msra.mxu0 %v910
        %929 = vmatprep.subr.bf16.mxu0 0
        %930 = vmatpush1.bf16.msra.mxu0 %v911
        %931 = vmatprep.subr.bf16.mxu0 0
        %932 = vmatpush1.bf16.msra.mxu0 %v912
        %933 = vmatprep.subr.bf16.mxu0 0
        %934 = vmatpush1.bf16.msra.mxu0 %v913
        %935 = vmatprep.subr.bf16.mxu0 0
        %936 = vmatpush1.bf16.msra.mxu0 %v914
        %937 = vmatprep.subr.bf16.mxu0 0
        %938 = vmatpush1.bf16.msra.mxu0 %v915
        %939 = vmatprep.subr.bf16.mxu0 0
        %940 = vmatpush1.bf16.msra.mxu0 %v916
        %941 = vmatprep.subr.bf16.mxu0 0
        %942 = vmatpush1.bf16.msra.mxu0 0
        %943 = vmatprep.subr.bf16.mxu0 0
        %944 = vmatpush1.bf16.msra.mxu0 0
        %945 = vmatprep.subr.bf16.mxu0 0
        %946 = vmatpush1.bf16.msra.mxu0 0
        %947 = vmatprep.subr.bf16.mxu0 0
        %948 = vmatpush1.bf16.msra.mxu0 0
        %949 = vmatprep.subr.bf16.mxu0 0
        %950 = vmatpush1.bf16.msra.mxu0 0
        %951 = vmatprep.subr.bf16.mxu0 0
        %952 = vmatpush1.bf16.msra.mxu0 0
        %953 = vmatprep.subr.bf16.mxu0 0
        %954 = vmatpush1.bf16.msra.mxu0 0
        %955 = vmatprep.subr.bf16.mxu0 0
        %956 = vmatpush1.bf16.msra.mxu0 0
        %957 = vmatprep.mubr.bf16.mxu0 0
        %958 = vmatmul.mubr.bf16.gmra.mrb[0].mxu0 %v853
        %v959 = vpop.f32.mrb[0].mxu0
        %v960 = vadd.f32 %v875, %v959
        %v961 = vpop.f32.mrb[0].mxu0
        %v962 = vpop.f32.mrb[0].mxu0
        %v963 = vpop.f32.mrb[0].mxu0
        %964 = vdwg.mxu0
        %v965 = vmax.f32 %v960, 0.0
        %v966 = vpack.c.bf16 %v965, %v965
        %967 = vst [vmem:[%s500] sm:$0xf] %v966
        %v968 = vunpack.c.l.bf16 %v966
        %v969 = vrot.slane %v968, 4
        %v970 = vadd.f32 %v968, %v969
        %v971 = vrot.slane %v970, 2
        %v972 = vadd.f32 %v970, %v971
        %v973 = vrot.slane %v972, 1
        %v974 = vadd.f32 %v972, %v973
        %v975 = vmul.f32 %v968, %v968
        %v976 = vrot.slane %v975, 4
        %v977 = vadd.f32 %v975, %v976
        %v978 = vrot.slane %v977, 2
        %v979 = vadd.f32 %v977, %v978
        %v980 = vrot.slane %v979, 1
        %v981 = vadd.f32 %v979, %v980
        %v982 = vlaneseq
        %v983 = vshrl.u32 %v982, 7
        %vm984 = vcmp.eq.s32.totalorder %v983, 0
        %vm985 = vcmp.eq.s32.totalorder %v983, 1
        %v986 = vsel %vm985, %v981, 0.0
        %v987 = vsel %vm984, %v974, %v986
        %988 = vst [vmem:[%s507] sm:$0xff] %v987
        %s989 = sand.u32 %s265, 1
        %s990 = scalar_lea.sflag [#allocation4], %s989
        %s991 = sand.u32 %s265, 1
        %s992 = smul.addr %s991, 4
        %s993 = scalar_lea.vmem [#allocation13], %s992
        %s994 = sand.u32 %s291, 1
        %s995 = scalar_lea.sflag [#allocation15], %s994
        %s996 = sand.u32 %s291, 1
        %s997 = smul.addr %s996, 8
        %s998 = scalar_lea.vmem [#allocation14], %s997
        // Predicated region
        $region85: #{tpu_custom_call.1} parent=59 // pred_check
          %p999 = pneg %p275
        $region86: #{tpu_custom_call.1} parent=59 // pred_check_branch
          %1001 = sbr.rel (%p999) target = $region88
        $region87: #{tpu_custom_call.1} parent=59 // pred_region
          %s1003 = ssub.s32 64, 64
          %1004 = vsyncadd %s990, %s1003
          %s1005 = smul.addr %s37, 64
          %s1006 = scalar_lea.hbm %s10, %s1005
          %s1008 = sshll.u32 %s993, 4
          %s1009 = int_to_ptr.vmem [resolvable:$true] %s1008
          %1011 = dma.vmem_to_hbm [thread:$0]  %s1009, 64, %s1006, %s990
        $region88: #{tpu_custom_call.1} parent=59 // pred_fallthru
          _
        // Predicated region
        $region89: #{tpu_custom_call.1} parent=59 // pred_check
          %p1012 = pneg %p301
        $region90: #{tpu_custom_call.1} parent=59 // pred_check_branch
          %1014 = sbr.rel (%p1012) target = $region92
        $region91: #{tpu_custom_call.1} parent=59 // pred_region
          %s1016 = ssub.s32 128, 128
          %1017 = vsyncadd %s995, %s1016
          %s1018 = smul.addr %s37, 128
          %s1019 = scalar_lea.hbm %s11, %s1018
          %s1021 = sshll.u32 %s998, 4
          %s1022 = int_to_ptr.vmem [resolvable:$true] %s1021
          %1024 = dma.vmem_to_hbm [thread:$0]  %s1022, 128, %s1019, %s995
        $region92: #{tpu_custom_call.1} parent=59 // pred_fallthru
          _
      $region60: #{tpu_custom_call.1} parent=5 // pred_fallthru
        _
      %p1025 = scmp.le.s32.totalorder 2, %s32
      // Predicated region
      $region93: #{tpu_custom_call.1} parent=5 // pred_check
        %p1026 = pneg %p1025
      $region94: #{tpu_custom_call.1} parent=5 // pred_check_branch
        %1028 = sbr.rel (%p1026) target = $region96
      $region95: #{tpu_custom_call.1} parent=5 // pred_region
        %s1029 = ssub.s32 %s32, 2
        // Predicated region
        $region97: #{tpu_custom_call.1} parent=95 // pred_check
          %p1030 = pneg %p281
        $region98: #{tpu_custom_call.1} parent=95 // pred_check_branch
          %1032 = sbr.rel (%p1030) target = $region100
        $region99: #{tpu_custom_call.1} parent=95 // pred_region
          %s1033 = sand.u32 %s266, 1
          %s1034 = scalar_lea.sflag [#allocation4], %s1033
          %s1035 = sand.u32 %s266, 1
          %s1036 = smul.addr %s1035, 4
          %s1037 = scalar_lea.vmem [#allocation13], %s1036
          %1038 = dma.done %s1034, 64
        $region100: #{tpu_custom_call.1} parent=95 // pred_fallthru
          _
        // Predicated region
        $region101: #{tpu_custom_call.1} parent=95 // pred_check
          %p1039 = pneg %p307
        $region102: #{tpu_custom_call.1} parent=95 // pred_check_branch
          %1041 = sbr.rel (%p1039) target = $region104
        $region103: #{tpu_custom_call.1} parent=95 // pred_region
          %s1042 = sand.u32 %s292, 1
          %s1043 = scalar_lea.sflag [#allocation15], %s1042
          %s1044 = sand.u32 %s292, 1
          %s1045 = smul.addr %s1044, 8
          %s1046 = scalar_lea.vmem [#allocation14], %s1045
          %1047 = dma.done %s1043, 128
        $region104: #{tpu_custom_call.1} parent=95 // pred_fallthru
          _
      $region96: #{tpu_custom_call.1} parent=5 // pred_fallthru
        _
    $region6: #{tpu_custom_call.1} parent=1 // loop_footer
      %s36 = sadd.s32 1, %s32
    $region7: #{tpu_custom_call.1} parent=1 // loop_footer_branch
      %31 = sbr.rel target = $region3
    $region8: #{tpu_custom_call.1} parent=1 // loop_exit
      _
    %1048 = vsyncpa [#allocation3], 1
    %s1049 = scalar_lea.sflag [#allocation3], 1
    %1050 = vsyncpa %s1049, 1
    %1051 = vsyncpa [#allocation6], 1
    %s1052 = scalar_lea.sflag [#allocation6], 1
    %1053 = vsyncpa %s1052, 1
    %1054 = vsyncpa [#allocation9], 1
    %1055 = vsyncpa [#allocation12], 1
    %1056 = vsyncpa [#allocation4], 1
    %s1057 = scalar_lea.sflag [#allocation4], 1
    %1058 = vsyncpa %s1057, 1
    %1059 = vsyncpa [#allocation15], 1
    %s1060 = scalar_lea.sflag [#allocation15], 1
    %1061 = vsyncpa %s1060, 1

</llo_original>
